<compile_context>
chip_gen: v7x
topology: tpu7x:2x2x1
jax: 0.10.0
libtpu: 0.0.40
codegen_flags: <defaults>
</compile_context>

<pallas_src>
import functools

import jax
import jax.numpy as jnp
from jax.experimental import pallas as pl
from jax.experimental.pallas import tpu as pltpu


def _vmem_budget():
    """Returns (per-step VMEM footprint budget, vmem_limit_bytes)."""
    try:
        cap = pltpu.get_tpu_info().vmem_capacity_bytes
    except Exception:  # trace-time query unavailable -> conservative default
        cap = None
    if cap is not None and cap <= (64 << 20):
        # v7x-class: 64 MiB physical VMEM but ~3.2 TB/s HBM -> bigger blocks
        # (amortize the ~0.35us per-step overhead), explicit scoped limit.
        return 36 << 20, 48 << 20
    # v5e / v6e class (128 MiB physical VMEM, lower HBM BW): moderate blocks
    # well inside the default scoped limits, but set the limit explicitly.
    return 20 << 20, 48 << 20


def _choose_tile_rows(rows, hidden, in_isz, out_isz, budget_bytes):
    """Row-tile size: budget-aware, sublane-pack aligned, >= ~8 grid steps."""
    min_isz = max(1, min(in_isz, out_isz))
    pack = 8 * max(1, 4 // min_isz)  # 8 for f32, 16 for bf16, 32 for int8/fp8
    if rows <= pack:
        # Single block covering the full row extent (legal: equals array dim).
        return rows
    # Per-row VMEM footprint: double-buffered input + output blocks, plus
    # ~2 full-tile f32 temporaries inside the kernel (x.astype(f32), result).
    bytes_per_row = hidden * (2 * in_isz + 2 * out_isz + 2 * 4)
    tr = budget_bytes // max(1, bytes_per_row)
    # Keep at least ~8 grid steps when there is enough work, so v7x's two
    # TensorCores both get shards of the "parallel" axis and the pipeline
    # has depth; never shrink below one packed sublane group.
    tr = min(tr, max(pack, rows // 8))
    tr = max(pack, (tr // pack) * pack)
    return min(tr, rows)


def _maxnorm_kernel(x_ref, gamma_ref, beta_ref, o_ref, *, eps, hidden):
    # x_ref: (tile_rows, hidden); gamma/beta: (1, hidden).
    x = x_ref[...].astype(jnp.float32)
    ax = jnp.abs(x)
    if hidden % 128 == 0 and hidden > 128:
        # Two-stage reduction: elementwise maxima over 128-lane slabs (VPU),
        # then one cross-lane reduce of 128 lanes per row (XLU).
        m = ax[:, 0:128]
        for j in range(1, hidden // 128):
            m = jnp.maximum(m, ax[:, j * 128:(j + 1) * 128])
        max_val = jnp.max(m, axis=-1, keepdims=True) + eps
    else:
        max_val = jnp.max(ax, axis=-1, keepdims=True) + eps
    # EUP approximate reciprocal (separate VLIW slot) + one Newton refinement
    # on the (tile_rows, 1) column -> near-exact f32 division, essentially free.
    inv = pl.reciprocal(max_val, approx=True)
    inv = inv * (2.0 - max_val * inv)
    g = gamma_ref[...].astype(jnp.float32)
    b = beta_ref[...].astype(jnp.float32)
    o_ref[...] = (g * (x * inv) + b).astype(o_ref.dtype)


def max_norm(x, gamma, beta, eps=1e-8, tile_rows=None, out_dtype=None):
    """x: (..., hidden) float array; gamma/beta: (hidden,)."""
    orig_shape = x.shape
    hidden = orig_shape[-1]
    rows = 1
    for d in orig_shape[:-1]:
        rows *= d

    if out_dtype is None:
        # Match PyTorch's type promotion (f32 params * low-precision x -> f32).
        out_dtype = jnp.result_type(x.dtype, gamma.dtype, beta.dtype)

    in_isz = jnp.dtype(x.dtype).itemsize
    out_isz = jnp.dtype(out_dtype).itemsize
    budget, vmem_limit = _vmem_budget()
    if tile_rows is None:
        tile_rows = _choose_tile_rows(rows, hidden, in_isz, out_isz, budget)

    x2 = x.reshape(rows, hidden)
    gamma2 = gamma.reshape(1, hidden)
    beta2 = beta.reshape(1, hidden)

    # No row padding: the partial last block computes on unspecified rows,
    # but Pallas masks the boundary stores so they never reach HBM.
    grid = (pl.cdiv(rows, tile_rows),)

    out = pl.pallas_call(
        functools.partial(_maxnorm_kernel, eps=eps, hidden=hidden),
        out_shape=jax.ShapeDtypeStruct((rows, hidden), out_dtype),
        grid_spec=pltpu.PrefetchScalarGridSpec(
            num_scalar_prefetch=0,
            grid=grid,
            in_specs=[
                pl.BlockSpec((tile_rows, hidden), lambda i: (i, 0)),
                pl.BlockSpec((1, hidden), lambda i: (0, 0)),
                pl.BlockSpec((1, hidden), lambda i: (0, 0)),
            ],
            out_specs=pl.BlockSpec((tile_rows, hidden), lambda i: (i, 0)),
        ),
        compiler_params=pltpu.CompilerParams(
            dimension_semantics=("parallel",),
            vmem_limit_bytes=vmem_limit,
        ),
    )(x2, gamma2, beta2)

    return out.reshape(orig_shape)


def _reference(x, gamma, beta, eps):
    max_val = jnp.max(jnp.abs(x), axis=-1, keepdims=True) + eps
    return gamma * (x / max_val) + beta


if __name__ == "__main__":
    key = jax.random.PRNGKey(0)

    # Primary smoke test: shapes implied by the module's forward.
    batch, seq, hidden = 2, 8, 32
    x = jax.random.normal(key, (batch, seq, hidden), dtype=jnp.float32)
    gamma = jnp.ones((hidden,), dtype=jnp.float32)   # nn.Parameter(torch.ones)
    beta = jnp.zeros((hidden,), dtype=jnp.float32)   # nn.Parameter(torch.zeros)

    out = max_norm(x, gamma, beta, eps=1e-8)
    out = jax.block_until_ready(out)
    ref = _reference(x, gamma, beta, 1e-8)
    assert out.shape == ref.shape
    assert jnp.allclose(out, ref, atol=1e-5, rtol=1e-5), "mismatch vs reference"

    # Secondary check: exercises the partial boundary block (rows % tile != 0)
    # and the two-stage 128-lane reduction (hidden multiple of 128).
    k2 = jax.random.PRNGKey(1)
    x2 = jax.random.normal(k2, (3, 5, 256), dtype=jnp.float32)
    g2 = jnp.ones((256,), dtype=jnp.float32)
    b2 = jnp.zeros((256,), dtype=jnp.float32)
    out2 = jax.block_until_ready(max_norm(x2, g2, b2, eps=1e-8))
    ref2 = _reference(x2, g2, b2, 1e-8)
    assert out2.shape == ref2.shape
    assert jnp.allclose(out2, ref2, atol=1e-5, rtol=1e-5), "mismatch (case 2)"

    print("KERNEL_OK")
</pallas_src>

<mosaic_0001>
module attributes {stable_mosaic.version = 11 : i64} {
  func.func @_maxnorm_kernel(%arg0: i32, %arg1: memref<8x32xf32, #tpu.memory_space<vmem>>, %arg2: memref<1x32xf32, #tpu.memory_space<vmem>>, %arg3: memref<1x32xf32, #tpu.memory_space<vmem>>, %arg4: memref<8x32xf32, #tpu.memory_space<vmem>>) attributes {dimension_semantics = [#tpu.dimension_semantics<parallel>], iteration_bounds = array<i64: 2>, scalar_prefetch = 0 : i64, scratch_operands = 0 : i64, tpu.core_type = #tpu.core_type<tc>, window_params = [{transform_indices = @transform_0, window_bounds = array<i64: 8, 32>}, {pipeline_mode = #tpu.pipeline_mode<synchronous>, transform_indices = @transform_1, window_bounds = array<i64: 1, 32>}, {pipeline_mode = #tpu.pipeline_mode<synchronous>, transform_indices = @transform_2, window_bounds = array<i64: 1, 32>}, {transform_indices = @transform_3, window_bounds = array<i64: 8, 32>}]} {
    %c0 = arith.constant 0 : index
    %c0_0 = arith.constant 0 : index
    %0 = vector.load %arg1[%c0, %c0_0] : memref<8x32xf32, #tpu.memory_space<vmem>>, vector<8x32xf32>
    %1 = math.absf %0 : vector<8x32xf32>
    %cst = arith.constant dense<0xFF800000> : vector<8xf32>
    %2 = vector.multi_reduction <maximumf>, %1, %cst [1] : vector<8x32xf32> to vector<8xf32>
    %3 = vector.shape_cast %2 : vector<8xf32> to vector<8x1xf32>
    %cst_1 = arith.constant 9.99999993E-9 : f32
    %4 = vector.broadcast %cst_1 : f32 to vector<8x1xf32>
    %5 = arith.addf %3, %4 : vector<8x1xf32>
    %6 = tpu.reciprocal %5 {approx = true} : vector<8x1xf32> -> vector<8x1xf32>
    %7 = arith.mulf %5, %6 : vector<8x1xf32>
    %cst_2 = arith.constant 2.000000e+00 : f32
    %8 = vector.broadcast %cst_2 : f32 to vector<8x1xf32>
    %9 = arith.subf %8, %7 : vector<8x1xf32>
    %10 = arith.mulf %6, %9 : vector<8x1xf32>
    %c0_3 = arith.constant 0 : index
    %c0_4 = arith.constant 0 : index
    %11 = vector.load %arg2[%c0_3, %c0_4] : memref<1x32xf32, #tpu.memory_space<vmem>>, vector<1x32xf32>
    %c0_5 = arith.constant 0 : index
    %c0_6 = arith.constant 0 : index
    %12 = vector.load %arg3[%c0_5, %c0_6] : memref<1x32xf32, #tpu.memory_space<vmem>>, vector<1x32xf32>
    %13 = vector.broadcast %10 : vector<8x1xf32> to vector<8x32xf32>
    %14 = arith.mulf %0, %13 : vector<8x32xf32>
    %15 = vector.broadcast %11 : vector<1x32xf32> to vector<8x32xf32>
    %16 = arith.mulf %15, %14 : vector<8x32xf32>
    %17 = vector.broadcast %12 : vector<1x32xf32> to vector<8x32xf32>
    %18 = arith.addf %16, %17 : vector<8x32xf32>
    %c0_7 = arith.constant 0 : index
    %c0_8 = arith.constant 0 : index
    %19 = vector.load %arg4[%c0_7, %c0_8] : memref<8x32xf32, #tpu.memory_space<vmem>>, vector<8x32xf32>
    tpu.vector_store %arg4[%c0_7, %c0_8], %18 {strides = array<i32>} : memref<8x32xf32, #tpu.memory_space<vmem>>, vector<8x32xf32>,
    return
  }
  func.func @transform_0(%arg0: i32) -> (i32, i32) {
    %c0_i32 = arith.constant 0 : i32
    %c0_i32_0 = arith.constant 0 : i32
    return %arg0, %c0_i32 : i32, i32
  }
  func.func @transform_1(%arg0: i32) -> (i32, i32) {
    %c0_i32 = arith.constant 0 : i32
    %c0_i32_0 = arith.constant 0 : i32
    %c0_i32_1 = arith.constant 0 : i32
    return %c0_i32, %c0_i32_0 : i32, i32
  }
  func.func @transform_2(%arg0: i32) -> (i32, i32) {
    %c0_i32 = arith.constant 0 : i32
    %c0_i32_0 = arith.constant 0 : i32
    %c0_i32_1 = arith.constant 0 : i32
    return %c0_i32, %c0_i32_0 : i32, i32
  }
  func.func @transform_3(%arg0: i32) -> (i32, i32) {
    %c0_i32 = arith.constant 0 : i32
    %c0_i32_0 = arith.constant 0 : i32
    return %arg0, %c0_i32 : i32, i32
  }
}

</mosaic_0001>

<llo_original>
// kernel: tpu_custom_call.1
$region0: #{tpu_custom_call.1}
  #allocation0 [shape = 'u32[]', space=smem, size = 0x4, offset = 0x4, fixed_abs, tag = 'smem constant byte address 0x4 - core index']
  #allocation1 [shape = 'u32[144,128]{1,0:T(1,128)}', space=vmem, size = 0x12000, scoped, tag = 'internal scratch']
  %s0 = inlined_call_operand.hbm [shape: f32[16,32], index: 0, kind: input, shape index: {}]
  %s1 = inlined_call_operand.vmem [shape: f32[1,32], index: 1, kind: input, shape index: {}]
  %s2 = inlined_call_operand.vmem [shape: f32[1,32], index: 2, kind: input, shape index: {}]
  %s3 = inlined_call_operand.hbm [shape: f32[16,32], index: 3, kind: output, shape index: {}]
  %s4 = sld [smem:[#allocation0]]
  $region49: #{tpu_custom_call.1} parent=0
    _
  %s6 = ssub.s32 1, %s4
  %s7 = scalar_select 0, %s6, %s4
  $region1: #{tpu_custom_call.1} parent=0
    #allocation2 [shape = 'u8[8192]{0}', space=vmem, size = 0x2000, scoped, tag = 'input window, operand 0']
    #allocation3 [shape = 's32[2]{0}', space=sflag, size = 0x8, scoped, tag = 'scoped memory for tpu_custom_call.1']
    #allocation4 [shape = 's32[2]{0}', space=sflag, size = 0x8, scoped, tag = 'scoped memory for tpu_custom_call.1']
    #allocation5 [shape = 'u8[8192]{0}', space=vmem, size = 0x2000, scoped, tag = 'output window, operand 0']
    %8 = vsyncpa [#allocation3], 0
    %s9 = scalar_lea.sflag [#allocation3], 1
    %10 = vsyncpa %s9, 0
    %11 = vsyncpa [#allocation4], 0
    %s12 = scalar_lea.sflag [#allocation4], 1
    %13 = vsyncpa %s12, 0
    loop: start=0, step=1, limit=4
    $region2: #{tpu_custom_call.1} parent=1 // loop_pre_header
      _
    $region3: #{tpu_custom_call.1} parent=1 // loop_header
      %s15 = sphi 0, %s19
      %p16 = scmp.ge.s32.totalorder %s15, 4
      %s25 = sphi 0, %s27
      %s28 = sphi 0, %s25
      %s29 = sphi 0, %s28
      %s45 = sphi 0, %s29
      %s49 = sphi 0, %s49
      %s51 = sphi 0, %s49
      %s52 = sphi 0, %s51
      %s66 = sphi 0, %s52
      %s70 = sphi 0, %s70
      %s72 = sphi 0, %s70
      %s73 = sphi 0, %s72
      %s87 = sphi 0, %s73
      %s93 = sphi 0, %s95
      %s96 = sphi 0, %s93
      %s97 = sphi 0, %s96
      %s113 = sphi 0, %s97
    $region4: #{tpu_custom_call.1} parent=1 // loop_header_branch
      %18 = sbr.rel (%p16) target = $region8
    $region5: #{tpu_custom_call.1} parent=1 // loop_body
      %s20 = ssub.s32 %s15, 1
      %s21 = ssub.s32 %s15, 2
      %s22 = sadd.s32 %s15, 1
      %s23 = ssub.s32 %s15, %s22
      %p24 = scmp.eq.s32.totalorder %s23, 0
      %s26 = sadd.s32 %s25, 1
      %s27 = scalar_select %p24, %s25, %s26
      %p30 = pneg %p24
      %p31 = scmp.eq.s32.totalorder %s15, 1
      %p32 = por %p30, %p31
      %p33 = scmp.ne.s32.totalorder %s25, %s28
      %p34 = scmp.eq.s32.totalorder %s15, 0
      %p35 = por %p33, %p34
      %p36 = scmp.ne.s32.totalorder %s25, %s28
      %p37 = scmp.eq.s32.totalorder %s20, 1
      %p38 = por %p36, %p37
      %p39 = scmp.ne.s32.totalorder %s28, %s29
      %p40 = scmp.eq.s32.totalorder %s20, 0
      %p41 = por %p39, %p40
      %p42 = scmp.ne.s32.totalorder %s28, %s29
      %p43 = scmp.eq.s32.totalorder %s21, 1
      %p44 = por %p42, %p43
      %p46 = scmp.ne.s32.totalorder %s29, %s45
      %p47 = scmp.eq.s32.totalorder %s21, 0
      %p48 = por %p46, %p47
      %s50 = sadd.s32 %s49, 1
      %p53 = scmp.eq.s32.totalorder %s15, 1
      %p54 = scmp.ne.s32.totalorder %s49, %s51
      %p55 = scmp.eq.s32.totalorder %s15, 0
      %p56 = por %p54, %p55
      %p57 = scmp.ne.s32.totalorder %s49, %s51
      %p58 = scmp.eq.s32.totalorder %s20, 1
      %p59 = por %p57, %p58
      %p60 = scmp.ne.s32.totalorder %s51, %s52
      %p61 = scmp.eq.s32.totalorder %s20, 0
      %p62 = por %p60, %p61
      %p63 = scmp.ne.s32.totalorder %s51, %s52
      %p64 = scmp.eq.s32.totalorder %s21, 1
      %p65 = por %p63, %p64
      %p67 = scmp.ne.s32.totalorder %s52, %s66
      %p68 = scmp.eq.s32.totalorder %s21, 0
      %p69 = por %p67, %p68
      %s71 = sadd.s32 %s70, 1
      %p74 = scmp.eq.s32.totalorder %s15, 1
      %p75 = scmp.ne.s32.totalorder %s70, %s72
      %p76 = scmp.eq.s32.totalorder %s15, 0
      %p77 = por %p75, %p76
      %p78 = scmp.ne.s32.totalorder %s70, %s72
      %p79 = scmp.eq.s32.totalorder %s20, 1
      %p80 = por %p78, %p79
      %p81 = scmp.ne.s32.totalorder %s72, %s73
      %p82 = scmp.eq.s32.totalorder %s20, 0
      %p83 = por %p81, %p82
      %p84 = scmp.ne.s32.totalorder %s72, %s73
      %p85 = scmp.eq.s32.totalorder %s21, 1
      %p86 = por %p84, %p85
      %p88 = scmp.ne.s32.totalorder %s73, %s87
      %p89 = scmp.eq.s32.totalorder %s21, 0
      %p90 = por %p88, %p89
      %s91 = ssub.s32 %s15, %s22
      %p92 = scmp.eq.s32.totalorder %s91, 0
      %s94 = sadd.s32 %s93, 1
      %s95 = scalar_select %p92, %s93, %s94
      %p98 = pneg %p92
      %p99 = scmp.eq.s32.totalorder %s15, 1
      %p100 = por %p98, %p99
      %p101 = scmp.ne.s32.totalorder %s93, %s96
      %p102 = scmp.eq.s32.totalorder %s15, 0
      %p103 = por %p101, %p102
      %p104 = scmp.ne.s32.totalorder %s93, %s96
      %p105 = scmp.eq.s32.totalorder %s20, 1
      %p106 = por %p104, %p105
      %p107 = scmp.ne.s32.totalorder %s96, %s97
      %p108 = scmp.eq.s32.totalorder %s20, 0
      %p109 = por %p107, %p108
      %p110 = scmp.ne.s32.totalorder %s96, %s97
      %p111 = scmp.eq.s32.totalorder %s21, 1
      %p112 = por %p110, %p111
      %p114 = scmp.ne.s32.totalorder %s97, %s113
      %p115 = scmp.eq.s32.totalorder %s21, 0
      %p116 = por %p114, %p115
      %p117 = scmp.le.s32.totalorder 1, %s15
      %p118 = scmp.lt.s32.totalorder %s15, 3
      %p119 = pnand %p117, %p118
      %p120 = pneg %p119
      // Predicated region
      $region9: #{tpu_custom_call.1} parent=5 // pred_check
        _
      $region10: #{tpu_custom_call.1} parent=5 // pred_check_branch
        %122 = sbr.rel (%p119) target = $region12
      $region11: #{tpu_custom_call.1} parent=5 // pred_region
        %s123 = ssub.s32 %s15, 1
        // Predicated region
        $region13: #{tpu_custom_call.1} parent=11 // pred_check
          %p124 = pneg %p62
        $region14: #{tpu_custom_call.1} parent=11 // pred_check_branch
          %126 = sbr.rel (%p124) target = $region16
        $region15: #{tpu_custom_call.1} parent=11 // pred_region
          _
        $region16: #{tpu_custom_call.1} parent=11 // pred_fallthru
          _
        // Predicated region
        $region17: #{tpu_custom_call.1} parent=11 // pred_check
          %p127 = pneg %p83
        $region18: #{tpu_custom_call.1} parent=11 // pred_check_branch
          %129 = sbr.rel (%p127) target = $region20
        $region19: #{tpu_custom_call.1} parent=11 // pred_region
          _
        $region20: #{tpu_custom_call.1} parent=11 // pred_fallthru
          _
      $region12: #{tpu_custom_call.1} parent=5 // pred_fallthru
        _
      %p130 = scmp.lt.s32.totalorder %s15, 2
      // Predicated region
      $region21: #{tpu_custom_call.1} parent=5 // pred_check
        %p131 = pneg %p130
      $region22: #{tpu_custom_call.1} parent=5 // pred_check_branch
        %133 = sbr.rel (%p131) target = $region24
      $region23: #{tpu_custom_call.1} parent=5 // pred_region
        // Predicated region
        $region25: #{tpu_custom_call.1} parent=23 // pred_check
          %p134 = pneg %p35
        $region26: #{tpu_custom_call.1} parent=23 // pred_check_branch
          %136 = sbr.rel (%p134) target = $region28
        $region27: #{tpu_custom_call.1} parent=23 // pred_region
          %s137 = sand.u32 %s25, 1
          %s138 = scalar_lea.sflag [#allocation3], %s137
          %s139 = sand.u32 %s25, 1
          %s140 = smul.addr %s139, 8
          %s141 = scalar_lea.vmem [#allocation2], %s140
          %s143 = ssub.s32 128, 128
          %144 = vsyncadd %s138, %s143
          %s145 = smul.addr %s15, 128
          %s146 = scalar_lea.hbm %s0, %s145
          %s148 = sshll.u32 %s141, 4
          %s149 = int_to_ptr.vmem [resolvable:$true] %s148
          %151 = dma.hbm_to_vmem [thread:$0]  %s146, 128, %s149, %s138
        $region28: #{tpu_custom_call.1} parent=23 // pred_fallthru
          _
      $region24: #{tpu_custom_call.1} parent=5 // pred_fallthru
        _
      %p152 = scmp.le.s32.totalorder 1, %s15
      %p153 = scmp.lt.s32.totalorder %s15, 3
      %p154 = pnand %p152, %p153
      %p155 = pneg %p154
      // Predicated region
      $region29: #{tpu_custom_call.1} parent=5 // pred_check
        _
      $region30: #{tpu_custom_call.1} parent=5 // pred_check_branch
        %157 = sbr.rel (%p154) target = $region32
      $region31: #{tpu_custom_call.1} parent=5 // pred_region
        %s158 = ssub.s32 %s15, 1
        %s159 = sand.u32 %s28, 1
        %s160 = scalar_lea.sflag [#allocation3], %s159
        %s161 = sand.u32 %s28, 1
        %s162 = smul.addr %s161, 8
        %s163 = scalar_lea.vmem [#allocation2], %s162
        // Predicated region
        $region33: #{tpu_custom_call.1} parent=31 // pred_check
          %p164 = pneg %p41
        $region34: #{tpu_custom_call.1} parent=31 // pred_check_branch
          %166 = sbr.rel (%p164) target = $region36
        $region35: #{tpu_custom_call.1} parent=31 // pred_region
          %167 = dma.done %s160, 128
        $region36: #{tpu_custom_call.1} parent=31 // pred_fallthru
          _
        %s168 = sand.u32 %s28, 1
        %s169 = scalar_lea.sflag [#allocation3], %s168
        %s170 = sand.u32 %s28, 1
        %s171 = smul.addr %s170, 8
        %s172 = scalar_lea.vmem [#allocation2], %s171
        %p173 = pneg %p41
        %p174 = pneg %p38
        %p175 = pneg %p62
        %p176 = pneg %p59
        %p177 = pneg %p83
        %p178 = pneg %p80
        %p179 = pneg %p109
        %p180 = pneg %p106
        %s181 = sand.u32 %s96, 1
        %s182 = scalar_lea.sflag [#allocation4], %s181
        %s183 = sand.u32 %s96, 1
        %s184 = smul.addr %s183, 8
        %s185 = scalar_lea.vmem [#allocation5], %s184
        %v186 = vld [vmem:[%s163] sm:$0xff]
        %v187 = vand.u32 2147483647, %v186
        %vm188 = vcmask 261120
        %v189 = vsel %vm188, %v187, -inf
        %190 = vmax.xlane.f32.xlu0 %v189
        %v191 = vpop.xlane.xlu0 %190
        %v192 = vadd.f32 %v191, 1e-08
        %v193 = vrcp.pop %v192
        %v194 = vmul.f32 %v192, %v193
        %v195 = vsub.f32 2.0, %v194
        %v196 = vmul.f32 %v193, %v195
        %v197 = vld [vmem:[%s1] sm:$0x1]
        %v198 = vld [vmem:[%s2] sm:$0x1]
        %v199 = vmul.f32 %v186, %v196
        %v201 = vlaneseq
        %v202 = vshrl.u32 %v201, 7
        %v203 = vsub.s32 0, %v202
        %v204 = vrot.slane %v197, %v203
        %v206 = vmul.f32 %v204, %v199
        %v208 = vlaneseq
        %v209 = vshrl.u32 %v208, 7
        %v210 = vsub.s32 0, %v209
        %v211 = vrot.slane %v198, %v210
        %v213 = vadd.f32 %v206, %v211
        %214 = vst.msk [vmem:[%s185] sm:$0xff] %vm188, %v213
        %s215 = sand.u32 %s96, 1
        %s216 = scalar_lea.sflag [#allocation4], %s215
        %s217 = sand.u32 %s96, 1
        %s218 = smul.addr %s217, 8
        %s219 = scalar_lea.vmem [#allocation5], %s218
        // Predicated region
        $region37: #{tpu_custom_call.1} parent=31 // pred_check
          %p220 = pneg %p106
        $region38: #{tpu_custom_call.1} parent=31 // pred_check_branch
          %222 = sbr.rel (%p220) target = $region40
        $region39: #{tpu_custom_call.1} parent=31 // pred_region
          %s224 = ssub.s32 128, 128
          %225 = vsyncadd %s216, %s224
          %s226 = smul.addr %s20, 128
          %s227 = scalar_lea.hbm %s3, %s226
          %s229 = sshll.u32 %s219, 4
          %s230 = int_to_ptr.vmem [resolvable:$true] %s229
          %232 = dma.vmem_to_hbm [thread:$0]  %s230, 128, %s227, %s216
        $region40: #{tpu_custom_call.1} parent=31 // pred_fallthru
          _
      $region32: #{tpu_custom_call.1} parent=5 // pred_fallthru
        _
      %p233 = scmp.le.s32.totalorder 2, %s15
      // Predicated region
      $region41: #{tpu_custom_call.1} parent=5 // pred_check
        %p234 = pneg %p233
      $region42: #{tpu_custom_call.1} parent=5 // pred_check_branch
        %236 = sbr.rel (%p234) target = $region44
      $region43: #{tpu_custom_call.1} parent=5 // pred_region
        %s237 = ssub.s32 %s15, 2
        // Predicated region
        $region45: #{tpu_custom_call.1} parent=43 // pred_check
          %p238 = pneg %p112
        $region46: #{tpu_custom_call.1} parent=43 // pred_check_branch
          %240 = sbr.rel (%p238) target = $region48
        $region47: #{tpu_custom_call.1} parent=43 // pred_region
          %s241 = sand.u32 %s97, 1
          %s242 = scalar_lea.sflag [#allocation4], %s241
          %s243 = sand.u32 %s97, 1
          %s244 = smul.addr %s243, 8
          %s245 = scalar_lea.vmem [#allocation5], %s244
          %246 = dma.done %s242, 128
        $region48: #{tpu_custom_call.1} parent=43 // pred_fallthru
          _
      $region44: #{tpu_custom_call.1} parent=5 // pred_fallthru
        _
    $region6: #{tpu_custom_call.1} parent=1 // loop_footer
      %s19 = sadd.s32 1, %s15
    $region7: #{tpu_custom_call.1} parent=1 // loop_footer_branch
      %14 = sbr.rel target = $region3
    $region8: #{tpu_custom_call.1} parent=1 // loop_exit
      _
    %247 = vsyncpa [#allocation3], 1
    %s248 = scalar_lea.sflag [#allocation3], 1
    %249 = vsyncpa %s248, 1
    %250 = vsyncpa [#allocation4], 1
    %s251 = scalar_lea.sflag [#allocation4], 1
    %252 = vsyncpa %s251, 1

</llo_original>
